<compile_context>
chip_gen: v7x
topology: tpu7x:2x2x1
jax: 0.10.0
libtpu: 0.0.40
codegen_flags: <defaults>
</compile_context>

<pallas_src>
import jax
import jax.numpy as jnp
from jax import lax
from jax.experimental import pallas as pl
from jax.experimental.pallas import tpu as pltpu

LANES = 128
SUBLANES = 8
TR_MAX = 8192                     # rows per grid step (4 MiB per f32 input block)
CHUNK_MAX = 128                   # rows per fused inner-loop step (16 vregs/input, f32)
VMEM_LIMIT = 40 * 1024 * 1024     # fits 2 inputs x 2 buffers x 4 MiB with headroom (<64 MiB v7x)


def _sublane_align(dtype):
    # Minimum sublane granularity for clean packed tiles: f32 -> 8, bf16 -> 16, int8/bool -> 32.
    return {4: 8, 2: 16, 1: 32}.get(jnp.dtype(dtype).itemsize, 8)


def _chunk_for(tr):
    for c in (CHUNK_MAX, 64, 32, 16, 8):
        if c <= tr and tr % c == 0:
            return c
    return tr


def _make_kernel(*, tr, chunk, nsplit, kb_per_split, total_blocks, valid_rows):
    """All parameters are static Python ints."""
    trips = tr // chunk
    groups = chunk // SUBLANES
    unroll = True if trips <= 8 else 4
    tail_partial = (valid_rows % tr) != 0
    guard_oob = (nsplit * kb_per_split) != total_blocks   # uneven split -> duplicate last block

    def accumulate(x_ref, t_ref, out_ref, base_row, masked):
        def body(c, carry):
            sx, st, sxt = carry
            r0 = pl.multiple_of(c * chunk, chunk)
            xc = x_ref[pl.ds(r0, chunk), :].astype(jnp.float32)
            tc = t_ref[pl.ds(r0, chunk), :].astype(jnp.float32)
            if masked:
                rid = base_row + r0 + lax.broadcasted_iota(jnp.int32, (chunk, LANES), 0)
                keep = rid < valid_rows
                xc = jnp.where(keep, xc, 0.0)
                tc = jnp.where(keep, tc, 0.0)
            xg = xc.reshape(groups, SUBLANES, LANES)
            tg = tc.reshape(groups, SUBLANES, LANES)
            return (sx + jnp.sum(xg, axis=0),
                    st + jnp.sum(tg, axis=0),
                    sxt + jnp.sum(xg * tg, axis=0))

        zero = jnp.zeros((SUBLANES, LANES), jnp.float32)
        sx, st, sxt = lax.fori_loop(0, trips, body, (zero, zero, zero), unroll=unroll)
        out_ref[0] += sxt   # TP  = sum(x * t)
        out_ref[1] += sx    # sum(x)
        out_ref[2] += st    # sum(t)

    def kernel(x_ref, t_ref, out_ref):
        k = pl.program_id(2)

        @pl.when(k == 0)
        def _():
            out_ref[...] = jnp.zeros_like(out_ref)

        kb = pl.program_id(0) * kb_per_split + k      # global row-block index
        base_row = kb * tr

        if tail_partial:
            last = total_blocks - 1
            pl.when(kb < last)(lambda: accumulate(x_ref, t_ref, out_ref, base_row, False))
            pl.when(kb == last)(lambda: accumulate(x_ref, t_ref, out_ref, base_row, True))
        elif guard_oob:
            pl.when(kb < total_blocks)(lambda: accumulate(x_ref, t_ref, out_ref, base_row, False))
        else:
            accumulate(x_ref, t_ref, out_ref, base_row, False)

    return kernel


def tversky_loss(inp, tgt, beta=0.5, weights=None, *, _tr_max=TR_MAX):
    """Matches TverskyLoss.forward(input, target, beta, weights) (weights unused)."""
    del weights  # unused, exactly like the PyTorch module
    N = tgt.shape[0]
    D = 1
    for s in inp.shape[1:]:
        D *= s

    x = inp.reshape(N, D)
    t = tgt.reshape(N, D)

    align = max(_sublane_align(x.dtype), _sublane_align(t.dtype))
    rows = pl.cdiv(D, LANES)
    rows_p = align if rows < align else rows
    d_pad = rows_p * LANES - D
    if d_pad:
        # Copy only when D is not 128-aligned (ragged lanes) or the sample is
        # smaller than one packed tile.  Zero padding contributes nothing to
        # sum(x), sum(t), sum(x*t).  Lane-aligned inputs take the free-reshape path.
        # TODO(synk): a fully copy-free path for D % 128 != 0 would need flat 1-D
        # blocks spanning sample boundaries; not worth the complexity here.
        x = jnp.pad(x, ((0, 0), (0, d_pad)))
        t = jnp.pad(t, ((0, 0), (0, d_pad)))
    x = x.reshape(N, rows_p, LANES)
    t = t.reshape(N, rows_p, LANES)

    tr = min((_tr_max // align) * align, (rows_p // align) * align)
    tr = max(tr, align)
    chunk = _chunk_for(tr)
    total_blocks = pl.cdiv(rows_p, tr)          # last block may be partial -> masked in kernel

    # v7x has 2 TensorCores: for odd/unit batch, split the reduction axis across
    # a leading "parallel" grid factor so the second core is used. Harmless on v5e/v6e.
    nsplit = 2 if (N % 2 == 1 and total_blocks >= 2) else 1
    kb_per_split = pl.cdiv(total_blocks, nsplit)

    if nsplit * kb_per_split == total_blocks:
        def row_block(s, k):
            return s * kb_per_split + k
    else:
        def row_block(s, k):    # clamp so no DMA is ever issued past the array end
            return jnp.minimum(s * kb_per_split + k, total_blocks - 1)

    in_idx = lambda s, i, k: (i, row_block(s, k), 0)

    kernel = _make_kernel(tr=tr, chunk=chunk, nsplit=nsplit,
                          kb_per_split=kb_per_split,
                          total_blocks=total_blocks, valid_rows=rows_p)

    sums = pl.pallas_call(
        kernel,
        out_shape=jax.ShapeDtypeStruct((N, nsplit, 3, SUBLANES, LANES), jnp.float32),
        grid=(nsplit, N, kb_per_split),
        in_specs=[
            pl.BlockSpec((None, tr, LANES), in_idx),
            pl.BlockSpec((None, tr, LANES), in_idx),
        ],
        out_specs=pl.BlockSpec((None, None, 3, SUBLANES, LANES),
                               lambda s, i, k: (i, s, 0, 0, 0)),
        compiler_params=pltpu.CompilerParams(
            dimension_semantics=("parallel", "parallel", "arbitrary"),
            vmem_limit_bytes=VMEM_LIMIT,
        ),
    )(x, t)

    # Tiny (N, S, 3, 8, 128) slab: reduce and apply the Tversky algebra in JAX.
    totals = jnp.sum(sums, axis=(1, 3, 4))            # (N, 3): [TP, sum(x), sum(t)]
    tp, sum_x, sum_t = totals[:, 0], totals[:, 1], totals[:, 2]

    smooth = 1.0
    # alpha = 1 - beta (exactly, as in the PyTorch module):
    #   TP + alpha*(sum_t - TP) + beta*(sum_x - TP) = (1-beta)*sum_t + beta*sum_x
    score = (tp + smooth) / ((1.0 - beta) * sum_t + beta * sum_x + smooth)
    return 1.0 - jnp.sum(score) / N


def _tversky_ref(inp, tgt, beta=0.5):
    N = tgt.shape[0]
    smooth = 1.0
    alpha = 1.0 - beta
    x = inp.reshape(N, -1).astype(jnp.float32)
    t = tgt.reshape(N, -1).astype(jnp.float32)
    inter = jnp.sum(x * t, axis=1)
    fn = jnp.sum(t * (1.0 - x), axis=1)
    fp = jnp.sum((1.0 - t) * x, axis=1)
    score = (inter + smooth) / (inter + alpha * fn + beta * fp + smooth)
    return 1.0 - jnp.sum(score) / N


if __name__ == "__main__":
    key = jax.random.PRNGKey(0)
    k1, k2, k3, k4 = jax.random.split(key, 4)

    # Case 1: standard NCHW, lane-aligned (D = 4*16*16 = 1024), even batch.
    x1 = jax.random.uniform(k1, (2, 4, 16, 16), dtype=jnp.float32)
    t1 = (jax.random.uniform(k2, (2, 4, 16, 16)) > 0.5).astype(jnp.float32)
    out1 = jax.block_until_ready(tversky_loss(x1, t1, beta=0.5))
    ref1 = _tversky_ref(x1, t1, beta=0.5)
    assert jnp.allclose(out1, ref1, rtol=1e-5, atol=1e-5), (out1, ref1)

    # Case 2: lane-unaligned feature size (D = 3*7*7 = 147 -> minimal pad), odd batch.
    x2 = jax.random.uniform(k3, (3, 3, 7, 7), dtype=jnp.float32)
    t2 = (jax.random.uniform(k4, (3, 3, 7, 7)) > 0.5).astype(jnp.float32)
    out2 = jax.block_until_ready(tversky_loss(x2, t2, beta=0.3))
    ref2 = _tversky_ref(x2, t2, beta=0.3)
    assert jnp.allclose(out2, ref2, rtol=1e-5, atol=1e-5), (out2, ref2)

    # Case 3: multi-block reduction with partial-tail masking and the 2-way
    # reduction split for N == 1 (small row tile forced for testing).
    x3 = jax.random.uniform(k1, (1, 1, 40, 128), dtype=jnp.float32)
    t3 = (jax.random.uniform(k2, (1, 1, 40, 128)) > 0.5).astype(jnp.float32)
    out3 = jax.block_until_ready(tversky_loss(x3, t3, beta=0.7, _tr_max=16))
    ref3 = _tversky_ref(x3, t3, beta=0.7)
    assert jnp.allclose(out3, ref3, rtol=1e-5, atol=1e-5), (out3, ref3)

    print("KERNEL_OK")
</pallas_src>

<mosaic_0001>
module attributes {stable_mosaic.version = 11 : i64} {
  func.func @kernel(%arg0: i32, %arg1: i32, %arg2: i32, %arg3: memref<1x8x128xf32, #tpu.memory_space<vmem>>, %arg4: memref<1x8x128xf32, #tpu.memory_space<vmem>>, %arg5: memref<1x1x3x8x128xf32, #tpu.memory_space<vmem>>) attributes {dimension_semantics = [#tpu.dimension_semantics<parallel>, #tpu.dimension_semantics<parallel>, #tpu.dimension_semantics<arbitrary>], iteration_bounds = array<i64: 1, 2, 1>, scalar_prefetch = 0 : i64, scratch_operands = 0 : i64, tpu.core_type = #tpu.core_type<tc>, window_params = [{transform_indices = @transform_0, window_bounds = array<i64: 1, 8, 128>}, {transform_indices = @transform_1, window_bounds = array<i64: 1, 8, 128>}, {transform_indices = @transform_2, window_bounds = array<i64: 1, 1, 3, 8, 128>}]} {
    %c0_i32 = arith.constant 0 : i32
    %0 = arith.cmpi eq, %arg2, %c0_i32 : i32
    %1 = arith.extui %0 : i1 to i32
    %c0_i32_0 = arith.constant 0 : i32
    %2 = arith.cmpi ne, %1, %c0_i32_0 : i32
    scf.if %2 {
      %cst_36 = arith.constant 0.000000e+00 : f32
      %39 = vector.broadcast %cst_36 : f32 to vector<3x8x128xf32>
      %c0_37 = arith.constant 0 : index
      %c0_38 = arith.constant 0 : index
      %c0_39 = arith.constant 0 : index
      %c0_40 = arith.constant 0 : index
      %c0_41 = arith.constant 0 : index
      %40 = vector.load %arg5[%c0_37, %c0_38, %c0_39, %c0_40, %c0_41] : memref<1x1x3x8x128xf32, #tpu.memory_space<vmem>>, vector<1x1x3x8x128xf32>
      %41 = vector.shape_cast %40 : vector<1x1x3x8x128xf32> to vector<3x8x128xf32>
      %42 = vector.shape_cast %39 : vector<3x8x128xf32> to vector<1x1x3x8x128xf32>
      tpu.vector_store %arg5[%c0_37, %c0_38, %c0_39, %c0_40, %c0_41], %42 {strides = array<i32>} : memref<1x1x3x8x128xf32, #tpu.memory_space<vmem>>, vector<1x1x3x8x128xf32>,
    } else {
    }
    %cst = arith.constant 0.000000e+00 : f32
    %3 = vector.broadcast %cst : f32 to vector<8x128xf32>
    %c0_i32_1 = arith.constant 0 : i32
    %c8_i32 = arith.constant 8 : i32
    %4 = arith.muli %c0_i32_1, %c8_i32 : i32
    %5 = tpu.assume_multiple %4, 8 : i32
    %c0 = arith.constant 0 : index
    %6 = arith.index_cast %5 : i32 to index
    %c0_2 = arith.constant 0 : index
    %7 = vector.load %arg3[%c0, %6, %c0_2] : memref<1x8x128xf32, #tpu.memory_space<vmem>>, vector<1x8x128xf32>
    %8 = vector.shape_cast %7 : vector<1x8x128xf32> to vector<8x128xf32>
    %c0_3 = arith.constant 0 : index
    %9 = arith.index_cast %5 : i32 to index
    %c0_4 = arith.constant 0 : index
    %10 = vector.load %arg4[%c0_3, %9, %c0_4] : memref<1x8x128xf32, #tpu.memory_space<vmem>>, vector<1x8x128xf32>
    %11 = vector.shape_cast %10 : vector<1x8x128xf32> to vector<8x128xf32>
    %12 = vector.shape_cast %8 : vector<8x128xf32> to vector<1x8x128xf32>
    %13 = vector.shape_cast %11 : vector<8x128xf32> to vector<1x8x128xf32>
    %cst_5 = arith.constant dense<0.000000e+00> : vector<8x128xf32>
    %14 = vector.multi_reduction <add>, %12, %cst_5 [0] : vector<1x8x128xf32> to vector<8x128xf32>
    %15 = arith.addf %3, %14 : vector<8x128xf32>
    %cst_6 = arith.constant dense<0.000000e+00> : vector<8x128xf32>
    %16 = vector.multi_reduction <add>, %13, %cst_6 [0] : vector<1x8x128xf32> to vector<8x128xf32>
    %17 = arith.addf %3, %16 : vector<8x128xf32>
    %18 = arith.mulf %12, %13 : vector<1x8x128xf32>
    %cst_7 = arith.constant dense<0.000000e+00> : vector<8x128xf32>
    %19 = vector.multi_reduction <add>, %18, %cst_7 [0] : vector<1x8x128xf32> to vector<8x128xf32>
    %20 = arith.addf %3, %19 : vector<8x128xf32>
    %c1_i32 = arith.constant 1 : i32
    %c0_8 = arith.constant 0 : index
    %c0_9 = arith.constant 0 : index
    %c0_10 = arith.constant 0 : index
    %c0_11 = arith.constant 0 : index
    %c0_12 = arith.constant 0 : index
    %21 = vector.load %arg5[%c0_8, %c0_9, %c0_10, %c0_11, %c0_12] : memref<1x1x3x8x128xf32, #tpu.memory_space<vmem>>, vector<1x1x1x8x128xf32>
    %22 = vector.shape_cast %21 : vector<1x1x1x8x128xf32> to vector<8x128xf32>
    %23 = arith.addf %22, %20 : vector<8x128xf32>
    %c0_13 = arith.constant 0 : index
    %c0_14 = arith.constant 0 : index
    %c0_15 = arith.constant 0 : index
    %c0_16 = arith.constant 0 : index
    %c0_17 = arith.constant 0 : index
    %24 = vector.load %arg5[%c0_13, %c0_14, %c0_15, %c0_16, %c0_17] : memref<1x1x3x8x128xf32, #tpu.memory_space<vmem>>, vector<1x1x1x8x128xf32>
    %25 = vector.shape_cast %24 : vector<1x1x1x8x128xf32> to vector<8x128xf32>
    %26 = vector.shape_cast %23 : vector<8x128xf32> to vector<1x1x1x8x128xf32>
    tpu.vector_store %arg5[%c0_13, %c0_14, %c0_15, %c0_16, %c0_17], %26 {strides = array<i32>} : memref<1x1x3x8x128xf32, #tpu.memory_space<vmem>>, vector<1x1x1x8x128xf32>,
    %c0_18 = arith.constant 0 : index
    %c0_19 = arith.constant 0 : index
    %c1 = arith.constant 1 : index
    %c0_20 = arith.constant 0 : index
    %c0_21 = arith.constant 0 : index
    %27 = vector.load %arg5[%c0_18, %c0_19, %c1, %c0_20, %c0_21] : memref<1x1x3x8x128xf32, #tpu.memory_space<vmem>>, vector<1x1x1x8x128xf32>
    %28 = vector.shape_cast %27 : vector<1x1x1x8x128xf32> to vector<8x128xf32>
    %29 = arith.addf %28, %15 : vector<8x128xf32>
    %c0_22 = arith.constant 0 : index
    %c0_23 = arith.constant 0 : index
    %c1_24 = arith.constant 1 : index
    %c0_25 = arith.constant 0 : index
    %c0_26 = arith.constant 0 : index
    %30 = vector.load %arg5[%c0_22, %c0_23, %c1_24, %c0_25, %c0_26] : memref<1x1x3x8x128xf32, #tpu.memory_space<vmem>>, vector<1x1x1x8x128xf32>
    %31 = vector.shape_cast %30 : vector<1x1x1x8x128xf32> to vector<8x128xf32>
    %32 = vector.shape_cast %29 : vector<8x128xf32> to vector<1x1x1x8x128xf32>
    tpu.vector_store %arg5[%c0_22, %c0_23, %c1_24, %c0_25, %c0_26], %32 {strides = array<i32>} : memref<1x1x3x8x128xf32, #tpu.memory_space<vmem>>, vector<1x1x1x8x128xf32>,
    %c0_27 = arith.constant 0 : index
    %c0_28 = arith.constant 0 : index
    %c2 = arith.constant 2 : index
    %c0_29 = arith.constant 0 : index
    %c0_30 = arith.constant 0 : index
    %33 = vector.load %arg5[%c0_27, %c0_28, %c2, %c0_29, %c0_30] : memref<1x1x3x8x128xf32, #tpu.memory_space<vmem>>, vector<1x1x1x8x128xf32>
    %34 = vector.shape_cast %33 : vector<1x1x1x8x128xf32> to vector<8x128xf32>
    %35 = arith.addf %34, %17 : vector<8x128xf32>
    %c0_31 = arith.constant 0 : index
    %c0_32 = arith.constant 0 : index
    %c2_33 = arith.constant 2 : index
    %c0_34 = arith.constant 0 : index
    %c0_35 = arith.constant 0 : index
    %36 = vector.load %arg5[%c0_31, %c0_32, %c2_33, %c0_34, %c0_35] : memref<1x1x3x8x128xf32, #tpu.memory_space<vmem>>, vector<1x1x1x8x128xf32>
    %37 = vector.shape_cast %36 : vector<1x1x1x8x128xf32> to vector<8x128xf32>
    %38 = vector.shape_cast %35 : vector<8x128xf32> to vector<1x1x1x8x128xf32>
    tpu.vector_store %arg5[%c0_31, %c0_32, %c2_33, %c0_34, %c0_35], %38 {strides = array<i32>} : memref<1x1x3x8x128xf32, #tpu.memory_space<vmem>>, vector<1x1x1x8x128xf32>,
    return
  }
  func.func @transform_0(%arg0: i32, %arg1: i32, %arg2: i32) -> (i32, i32, i32) {
    %c1_i32 = arith.constant 1 : i32
    %0 = arith.muli %arg0, %c1_i32 : i32
    %1 = arith.addi %0, %arg2 : i32
    %c0_i32 = arith.constant 0 : i32
    %c0_i32_0 = arith.constant 0 : i32
    return %arg1, %1, %c0_i32 : i32, i32, i32
  }
  func.func @transform_1(%arg0: i32, %arg1: i32, %arg2: i32) -> (i32, i32, i32) {
    %c1_i32 = arith.constant 1 : i32
    %0 = arith.muli %arg0, %c1_i32 : i32
    %1 = arith.addi %0, %arg2 : i32
    %c0_i32 = arith.constant 0 : i32
    %c0_i32_0 = arith.constant 0 : i32
    return %arg1, %1, %c0_i32 : i32, i32, i32
  }
  func.func @transform_2(%arg0: i32, %arg1: i32, %arg2: i32) -> (i32, i32, i32, i32, i32) {
    %c0_i32 = arith.constant 0 : i32
    %c0_i32_0 = arith.constant 0 : i32
    %c0_i32_1 = arith.constant 0 : i32
    %c0_i32_2 = arith.constant 0 : i32
    return %arg1, %arg0, %c0_i32, %c0_i32_0, %c0_i32_1 : i32, i32, i32, i32, i32
  }
}

</mosaic_0001>

<llo_original>
// kernel: tpu_custom_call.1
$region0: #{tpu_custom_call.1}
  #allocation0 [shape = 'u32[]', space=smem, size = 0x4, offset = 0x4, fixed_abs, tag = 'smem constant byte address 0x4 - core index']
  #allocation1 [shape = 'u32[144,128]{1,0:T(1,128)}', space=vmem, size = 0x12000, scoped, tag = 'internal scratch']
  %s0 = inlined_call_operand.hbm [shape: f32[2,8,128], index: 0, kind: input, shape index: {}]
  %s1 = inlined_call_operand.hbm [shape: f32[2,8,128], index: 1, kind: input, shape index: {}]
  %s2 = inlined_call_operand.hbm [shape: f32[2,1,3,8,128], index: 2, kind: output, shape index: {}]
  %s3 = sld [smem:[#allocation0]]
  $region53: #{tpu_custom_call.1} parent=0
    _
  %s5 = ssub.s32 1, %s3
  %s6 = scalar_select 0, %s5, %s3
  $region1: #{tpu_custom_call.1} parent=0
    #allocation2 [shape = 'u8[8192]{0}', space=vmem, size = 0x2000, scoped, tag = 'input window, operand 0']
    #allocation3 [shape = 's32[2]{0}', space=sflag, size = 0x8, scoped, tag = 'scoped memory for tpu_custom_call.1']
    #allocation4 [shape = 's32[2]{0}', space=sflag, size = 0x8, scoped, tag = 'scoped memory for tpu_custom_call.1']
    #allocation5 [shape = 'u8[8192]{0}', space=vmem, size = 0x2000, scoped, tag = 'input window, operand 1']
    #allocation6 [shape = 's32[2]{0}', space=sflag, size = 0x8, scoped, tag = 'scoped memory for tpu_custom_call.1']
    #allocation7 [shape = 'u8[24576]{0}', space=vmem, size = 0x6000, scoped, tag = 'output window, operand 0']
    %7 = vsyncpa [#allocation3], 0
    %s8 = scalar_lea.sflag [#allocation3], 1
    %9 = vsyncpa %s8, 0
    %10 = vsyncpa [#allocation6], 0
    %s11 = scalar_lea.sflag [#allocation6], 1
    %12 = vsyncpa %s11, 0
    %13 = vsyncpa [#allocation4], 0
    %s14 = scalar_lea.sflag [#allocation4], 1
    %15 = vsyncpa %s14, 0
    loop: start=0, step=1, limit=4
    $region2: #{tpu_custom_call.1} parent=1 // loop_pre_header
      _
    $region3: #{tpu_custom_call.1} parent=1 // loop_header
      %s17 = sphi 0, %s21
      %p18 = scmp.ge.s32.totalorder %s17, 4
      %s24 = sphi 0, %s43
      %s25 = sphi 0, %s39
      %s26 = sphi 0, %s35
      %s27 = sphi 0, %s24
      %s28 = sphi 0, %s25
      %s29 = sphi 0, %s26
      %s30 = sphi 0, %s27
      %s31 = sphi 0, %s28
      %s32 = sphi 0, %s29
      %s50 = sphi 0, %s52
      %s53 = sphi 0, %s50
      %s54 = sphi 0, %s53
      %s70 = sphi 0, %s54
      %s80 = sphi 0, %s82
      %s83 = sphi 0, %s80
      %s84 = sphi 0, %s83
      %s100 = sphi 0, %s84
      %s108 = sphi 0, %s110
      %s111 = sphi 0, %s108
      %s112 = sphi 0, %s111
      %s128 = sphi 0, %s112
    $region4: #{tpu_custom_call.1} parent=1 // loop_header_branch
      %20 = sbr.rel (%p18) target = $region8
    $region5: #{tpu_custom_call.1} parent=1 // loop_body
      %s22 = ssub.s32 %s17, 1
      %s23 = ssub.s32 %s17, 2
      %s33 = sadd.s32 1, %s26
      %p34 = scmp.ge.s32.totalorder %s33, 1
      %s35 = scalar_select %p34, 0, %s33
      %s36 = sadd.s32 1, %s25
      %s37 = scalar_select %p34, %s36, %s25
      %p38 = scmp.ge.s32.totalorder %s37, 2
      %s39 = scalar_select %p38, 0, %s37
      %s40 = sadd.s32 1, %s24
      %s41 = scalar_select %p38, %s40, %s24
      %p42 = scmp.ge.s32.totalorder %s41, 1
      %s43 = scalar_select %p42, 0, %s41
      %s44 = sadd.s32 %s24, %s26
      %s45 = sadd.s32 %s43, %s35
      %s46 = ssub.s32 %s25, %s39
      %s47 = ssub.s32 %s44, %s45
      %s48 = sor.u32 %s46, %s47
      %p49 = scmp.eq.s32.totalorder %s48, 0
      %s51 = sadd.s32 %s50, 1
      %s52 = scalar_select %p49, %s50, %s51
      %p55 = pneg %p49
      %p56 = scmp.eq.s32.totalorder %s17, 1
      %p57 = por %p55, %p56
      %p58 = scmp.ne.s32.totalorder %s50, %s53
      %p59 = scmp.eq.s32.totalorder %s17, 0
      %p60 = por %p58, %p59
      %p61 = scmp.ne.s32.totalorder %s50, %s53
      %p62 = scmp.eq.s32.totalorder %s22, 1
      %p63 = por %p61, %p62
      %p64 = scmp.ne.s32.totalorder %s53, %s54
      %p65 = scmp.eq.s32.totalorder %s22, 0
      %p66 = por %p64, %p65
      %p67 = scmp.ne.s32.totalorder %s53, %s54
      %p68 = scmp.eq.s32.totalorder %s23, 1
      %p69 = por %p67, %p68
      %p71 = scmp.ne.s32.totalorder %s54, %s70
      %p72 = scmp.eq.s32.totalorder %s23, 0
      %p73 = por %p71, %p72
      %s74 = sadd.s32 %s24, %s26
      %s75 = sadd.s32 %s43, %s35
      %s76 = ssub.s32 %s25, %s39
      %s77 = ssub.s32 %s74, %s75
      %s78 = sor.u32 %s76, %s77
      %p79 = scmp.eq.s32.totalorder %s78, 0
      %s81 = sadd.s32 %s80, 1
      %s82 = scalar_select %p79, %s80, %s81
      %p85 = pneg %p79
      %p86 = scmp.eq.s32.totalorder %s17, 1
      %p87 = por %p85, %p86
      %p88 = scmp.ne.s32.totalorder %s80, %s83
      %p89 = scmp.eq.s32.totalorder %s17, 0
      %p90 = por %p88, %p89
      %p91 = scmp.ne.s32.totalorder %s80, %s83
      %p92 = scmp.eq.s32.totalorder %s22, 1
      %p93 = por %p91, %p92
      %p94 = scmp.ne.s32.totalorder %s83, %s84
      %p95 = scmp.eq.s32.totalorder %s22, 0
      %p96 = por %p94, %p95
      %p97 = scmp.ne.s32.totalorder %s83, %s84
      %p98 = scmp.eq.s32.totalorder %s23, 1
      %p99 = por %p97, %p98
      %p101 = scmp.ne.s32.totalorder %s84, %s100
      %p102 = scmp.eq.s32.totalorder %s23, 0
      %p103 = por %p101, %p102
      %s104 = ssub.s32 %s25, %s39
      %s105 = ssub.s32 %s24, %s43
      %s106 = sor.u32 %s104, %s105
      %p107 = scmp.eq.s32.totalorder %s106, 0
      %s109 = sadd.s32 %s108, 1
      %s110 = scalar_select %p107, %s108, %s109
      %p113 = pneg %p107
      %p114 = scmp.eq.s32.totalorder %s17, 1
      %p115 = por %p113, %p114
      %p116 = scmp.ne.s32.totalorder %s108, %s111
      %p117 = scmp.eq.s32.totalorder %s17, 0
      %p118 = por %p116, %p117
      %p119 = scmp.ne.s32.totalorder %s108, %s111
      %p120 = scmp.eq.s32.totalorder %s22, 1
      %p121 = por %p119, %p120
      %p122 = scmp.ne.s32.totalorder %s111, %s112
      %p123 = scmp.eq.s32.totalorder %s22, 0
      %p124 = por %p122, %p123
      %p125 = scmp.ne.s32.totalorder %s111, %s112
      %p126 = scmp.eq.s32.totalorder %s23, 1
      %p127 = por %p125, %p126
      %p129 = scmp.ne.s32.totalorder %s112, %s128
      %p130 = scmp.eq.s32.totalorder %s23, 0
      %p131 = por %p129, %p130
      %p132 = scmp.le.s32.totalorder 1, %s17
      %p133 = scmp.lt.s32.totalorder %s17, 3
      %p134 = pnand %p132, %p133
      %p135 = pneg %p134
      // Predicated region
      $region9: #{tpu_custom_call.1} parent=5 // pred_check
        _
      $region10: #{tpu_custom_call.1} parent=5 // pred_check_branch
        %137 = sbr.rel (%p134) target = $region12
      $region11: #{tpu_custom_call.1} parent=5 // pred_region
        %s138 = ssub.s32 %s17, 1
      $region12: #{tpu_custom_call.1} parent=5 // pred_fallthru
        _
      %p139 = scmp.lt.s32.totalorder %s17, 2
      // Predicated region
      $region13: #{tpu_custom_call.1} parent=5 // pred_check
        %p140 = pneg %p139
      $region14: #{tpu_custom_call.1} parent=5 // pred_check_branch
        %142 = sbr.rel (%p140) target = $region16
      $region15: #{tpu_custom_call.1} parent=5 // pred_region
        // Predicated region
        $region17: #{tpu_custom_call.1} parent=15 // pred_check
          %p143 = pneg %p60
        $region18: #{tpu_custom_call.1} parent=15 // pred_check_branch
          %145 = sbr.rel (%p143) target = $region20
        $region19: #{tpu_custom_call.1} parent=15 // pred_region
          %s146 = sand.u32 %s50, 1
          %s147 = scalar_lea.sflag [#allocation3], %s146
          %s148 = sand.u32 %s50, 1
          %s149 = smul.addr %s148, 8
          %s150 = scalar_lea.vmem [#allocation2], %s149
          %s151 = sadd.s32 %s24, %s26
          %s153 = ssub.s32 128, 128
          %154 = vsyncadd %s147, %s153
          %s155 = sadd.s32 %s151, %s25
          %s156 = smul.addr %s155, 128
          %s157 = scalar_lea.hbm %s0, %s156
          %s159 = sshll.u32 %s150, 4
          %s160 = int_to_ptr.vmem [resolvable:$true] %s159
          %162 = dma.hbm_to_vmem [thread:$0]  %s157, 128, %s160, %s147
        $region20: #{tpu_custom_call.1} parent=15 // pred_fallthru
          _
        // Predicated region
        $region21: #{tpu_custom_call.1} parent=15 // pred_check
          %p163 = pneg %p90
        $region22: #{tpu_custom_call.1} parent=15 // pred_check_branch
          %165 = sbr.rel (%p163) target = $region24
        $region23: #{tpu_custom_call.1} parent=15 // pred_region
          %s166 = sand.u32 %s80, 1
          %s167 = scalar_lea.sflag [#allocation6], %s166
          %s168 = sand.u32 %s80, 1
          %s169 = smul.addr %s168, 8
          %s170 = scalar_lea.vmem [#allocation5], %s169
          %s171 = sadd.s32 %s24, %s26
          %s173 = ssub.s32 128, 128
          %174 = vsyncadd %s167, %s173
          %s175 = sadd.s32 %s171, %s25
          %s176 = smul.addr %s175, 128
          %s177 = scalar_lea.hbm %s1, %s176
          %s179 = sshll.u32 %s170, 4
          %s180 = int_to_ptr.vmem [resolvable:$true] %s179
          %182 = dma.hbm_to_vmem [thread:$0]  %s177, 128, %s180, %s167
        $region24: #{tpu_custom_call.1} parent=15 // pred_fallthru
          _
      $region16: #{tpu_custom_call.1} parent=5 // pred_fallthru
        _
      %p183 = scmp.le.s32.totalorder 1, %s17
      %p184 = scmp.lt.s32.totalorder %s17, 3
      %p185 = pnand %p183, %p184
      %p186 = pneg %p185
      // Predicated region
      $region25: #{tpu_custom_call.1} parent=5 // pred_check
        _
      $region26: #{tpu_custom_call.1} parent=5 // pred_check_branch
        %188 = sbr.rel (%p185) target = $region28
      $region27: #{tpu_custom_call.1} parent=5 // pred_region
        %s189 = ssub.s32 %s17, 1
        %s190 = sand.u32 %s53, 1
        %s191 = scalar_lea.sflag [#allocation3], %s190
        %s192 = sand.u32 %s53, 1
        %s193 = smul.addr %s192, 8
        %s194 = scalar_lea.vmem [#allocation2], %s193
        // Predicated region
        $region29: #{tpu_custom_call.1} parent=27 // pred_check
          %p195 = pneg %p66
        $region30: #{tpu_custom_call.1} parent=27 // pred_check_branch
          %197 = sbr.rel (%p195) target = $region32
        $region31: #{tpu_custom_call.1} parent=27 // pred_region
          %198 = dma.done %s191, 128
        $region32: #{tpu_custom_call.1} parent=27 // pred_fallthru
          _
        %s199 = sand.u32 %s83, 1
        %s200 = scalar_lea.sflag [#allocation6], %s199
        %s201 = sand.u32 %s83, 1
        %s202 = smul.addr %s201, 8
        %s203 = scalar_lea.vmem [#allocation5], %s202
        // Predicated region
        $region33: #{tpu_custom_call.1} parent=27 // pred_check
          %p204 = pneg %p96
        $region34: #{tpu_custom_call.1} parent=27 // pred_check_branch
          %206 = sbr.rel (%p204) target = $region36
        $region35: #{tpu_custom_call.1} parent=27 // pred_region
          %207 = dma.done %s200, 128
        $region36: #{tpu_custom_call.1} parent=27 // pred_fallthru
          _
        %s208 = sand.u32 %s53, 1
        %s209 = scalar_lea.sflag [#allocation3], %s208
        %s210 = sand.u32 %s53, 1
        %s211 = smul.addr %s210, 8
        %s212 = scalar_lea.vmem [#allocation2], %s211
        %p213 = pneg %p66
        %p214 = pneg %p63
        %s215 = sand.u32 %s83, 1
        %s216 = scalar_lea.sflag [#allocation6], %s215
        %s217 = sand.u32 %s83, 1
        %s218 = smul.addr %s217, 8
        %s219 = scalar_lea.vmem [#allocation5], %s218
        %p220 = pneg %p96
        %p221 = pneg %p93
        %p222 = pneg %p124
        %p223 = pneg %p121
        %s224 = sand.u32 %s111, 1
        %s225 = scalar_lea.sflag [#allocation4], %s224
        %s226 = sand.u32 %s111, 1
        %s227 = smul.addr %s226, 24
        %s228 = scalar_lea.vmem [#allocation7], %s227
        %s229 = sadd.s32 %s27, %s29
        %s230 = sadd.s32 %s27, %s29
        %p231 = scmp.eq.s32.totalorder %s29, 0
        // Predicated region
        $region37: #{tpu_custom_call.1} parent=27 // pred_check
          %p232 = pneg %p231
        $region38: #{tpu_custom_call.1} parent=27 // pred_check_branch
          %234 = sbr.rel (%p232) target = $region40
        $region39: #{tpu_custom_call.1} parent=27 // pred_region
          %235 = vst [vmem:[%s228] sm:$0xff] 0.0
          %236 = vst [vmem:[%s228 + $0x8] sm:$0xff] 0.0
          %237 = vst [vmem:[%s228 + $0x10] sm:$0xff] 0.0
        $region40: #{tpu_custom_call.1} parent=27 // pred_fallthru
          _
        %v238 = vld [vmem:[%s194] sm:$0xff]
        %v239 = vld [vmem:[%s203] sm:$0xff]
        %v240 = vadd.f32 %v238, 0.0
        %v241 = vadd.f32 %v240, 0.0
        %v242 = vadd.f32 %v239, 0.0
        %v243 = vadd.f32 %v242, 0.0
        %v244 = vmul.f32 %v238, %v239
        %v245 = vadd.f32 %v244, 0.0
        %v246 = vadd.f32 %v245, 0.0
        %v247 = vld [vmem:[%s228] sm:$0xff]
        %v248 = vadd.f32 %v247, %v246
        %249 = vst [vmem:[%s228] sm:$0xff] %v248
        %s250 = scalar_lea.vmem %s228, 8 [#allocation7]
        %v251 = vld [vmem:[%s250] sm:$0xff]
        %v252 = vadd.f32 %v251, %v241
        %253 = vst [vmem:[%s250] sm:$0xff] %v252
        %s254 = scalar_lea.vmem %s228, 16 [#allocation7]
        %v255 = vld [vmem:[%s254] sm:$0xff]
        %v256 = vadd.f32 %v255, %v243
        %257 = vst [vmem:[%s254] sm:$0xff] %v256
        %s258 = sand.u32 %s111, 1
        %s259 = scalar_lea.sflag [#allocation4], %s258
        %s260 = sand.u32 %s111, 1
        %s261 = smul.addr %s260, 24
        %s262 = scalar_lea.vmem [#allocation7], %s261
        // Predicated region
        $region41: #{tpu_custom_call.1} parent=27 // pred_check
          %p263 = pneg %p121
        $region42: #{tpu_custom_call.1} parent=27 // pred_check_branch
          %265 = sbr.rel (%p263) target = $region44
        $region43: #{tpu_custom_call.1} parent=27 // pred_region
          %s267 = ssub.s32 384, 384
          %268 = vsyncadd %s259, %s267
          %s269 = smul.addr %s27, 3
          %s270 = smul.addr %s28, 3
          %s271 = sadd.s32 %s269, %s270
          %s272 = smul.addr %s271, 128
          %s273 = scalar_lea.hbm %s2, %s272
          %s274 = sshll.u32 %s262, 4
          %s275 = int_to_ptr.vmem [resolvable:$true] %s274
          %280 = dma.vmem_to_hbm [thread:$0]  %s275, 384, %s273, %s259, 128, 128, 8
        $region44: #{tpu_custom_call.1} parent=27 // pred_fallthru
          _
      $region28: #{tpu_custom_call.1} parent=5 // pred_fallthru
        _
      %p281 = scmp.le.s32.totalorder 2, %s17
      // Predicated region
      $region45: #{tpu_custom_call.1} parent=5 // pred_check
        %p282 = pneg %p281
      $region46: #{tpu_custom_call.1} parent=5 // pred_check_branch
        %284 = sbr.rel (%p282) target = $region48
      $region47: #{tpu_custom_call.1} parent=5 // pred_region
        %s285 = ssub.s32 %s17, 2
        // Predicated region
        $region49: #{tpu_custom_call.1} parent=47 // pred_check
          %p286 = pneg %p127
        $region50: #{tpu_custom_call.1} parent=47 // pred_check_branch
          %288 = sbr.rel (%p286) target = $region52
        $region51: #{tpu_custom_call.1} parent=47 // pred_region
          %s289 = sand.u32 %s112, 1
          %s290 = scalar_lea.sflag [#allocation4], %s289
          %s291 = sand.u32 %s112, 1
          %s292 = smul.addr %s291, 24
          %s293 = scalar_lea.vmem [#allocation7], %s292
          %294 = dma.done %s290, 384
        $region52: #{tpu_custom_call.1} parent=47 // pred_fallthru
          _
      $region48: #{tpu_custom_call.1} parent=5 // pred_fallthru
        _
    $region6: #{tpu_custom_call.1} parent=1 // loop_footer
      %s21 = sadd.s32 1, %s17
    $region7: #{tpu_custom_call.1} parent=1 // loop_footer_branch
      %16 = sbr.rel target = $region3
    $region8: #{tpu_custom_call.1} parent=1 // loop_exit
      _
    %295 = vsyncpa [#allocation3], 1
    %s296 = scalar_lea.sflag [#allocation3], 1
    %297 = vsyncpa %s296, 1
    %298 = vsyncpa [#allocation6], 1
    %s299 = scalar_lea.sflag [#allocation6], 1
    %300 = vsyncpa %s299, 1
    %301 = vsyncpa [#allocation4], 1
    %s302 = scalar_lea.sflag [#allocation4], 1
    %303 = vsyncpa %s302, 1

</llo_original>
